<compile_context>
chip_gen: v6e
topology: v6e:2x2x1
jax: 0.10.0
libtpu: 0.0.40
codegen_flags: <defaults>
</compile_context>

<pallas_src>
import functools

import jax
import jax.numpy as jnp
from jax.experimental import pallas as pl
from jax.experimental.pallas import tpu as pltpu


# ----------------------------- VMEM budgeting --------------------------------
# Per-step working set =
#     2 inputs x 2 pipeline buffers x (TN, C) x in_itemsize      (DMA slabs)
#   + ~8 live f32 (TN, C) temporaries                            (VMEM temps,
#     blocks are far larger than the 64-vreg register file)
# Budgeted against the smallest part (v7x: 64 MiB physical / 32 MiB default
# scoped VMEM); v5e/v6e (128 MiB physical) use the same conservative cap, which
# already sits in the ~512-row tile regime that reaches ~85% of HBM roofline.
_LIVE_F32_TILES = 8
_WORKING_SET_BUDGET = 32 * 1024 * 1024     # target per-step working set
_VMEM_LIMIT_BYTES = 48 * 1024 * 1024       # explicit scoped-VMEM limit (< 64 MiB)
_MAX_BLOCK_ROWS = 1024


def _round_down(x, m):
    return (x // m) * m


def _round_up(x, m):
    return -(-x // m) * m


def _pick_block_rows(n_rows, n_cols, in_itemsize, requested=None):
    """Row-tile size: VMEM-budgeted, alignment-aware, megacore-friendly."""
    # bf16 packs two rows per sublane -> keep row tiles 16-aligned there.
    align = 16 if in_itemsize < 4 else 8
    if requested is None:
        bytes_per_row = n_cols * (2 * 2 * in_itemsize + _LIVE_F32_TILES * 4)
        tn = min(_MAX_BLOCK_ROWS,
                 max(align, _WORKING_SET_BUDGET // max(bytes_per_row, 1)))
    else:
        tn = requested
    tn = max(align, _round_down(tn, align))
    if tn < n_rows:
        return tn
    # Single-block case: best-effort split into >=2 grid steps so v7x can shard
    # the 'parallel' batch axis across its two TensorCores (no effect on
    # v5e/v6e beyond one extra ~0.35us grid step).
    if n_rows >= 2 * align:
        return _round_up(-(-n_rows // 2), align)
    return n_rows  # full-extent block: no divisibility requirement


# --------------------------------- kernel ------------------------------------
def _jsd_kernel(out_logits_ref, tgt_logits_ref, partial_ref, *, n_rows, block_rows):
    i = pl.program_id(0)

    x = out_logits_ref[...].astype(jnp.float32)  # (TN, C) logits ("output")
    y = tgt_logits_ref[...].astype(jnp.float32)  # (TN, C) logits ("target")

    def softmax_and_logsoftmax(z):
        m = jnp.max(z, axis=-1, keepdims=True)
        zc = z - m
        e = jnp.exp(zc)                              # EUP: 1 exp / element
        s = jnp.sum(e, axis=-1, keepdims=True)       # XLU lane reduce (slack)
        r = pl.reciprocal(s, approx=True)            # EUP vrcp on (TN, 1)
        r = r * (2.0 - s * r)                        # one Newton step -> ~f32 exact
        p = e * r
        logp = zc - jnp.log(s)                       # log-softmax reuses the lse
        return p, logp

    p0, logp0 = softmax_and_logsoftmax(x)
    p1, logp1 = softmax_and_logsoftmax(y)

    # log of the clamped mixture: matches torch.clamp(mean(probs), 1e-7, 1).log()
    logm = jnp.log(jnp.clip(0.5 * (p0 + p1), 1e-7, 1.0))  # EUP: 1 log / element

    # Pointwise KL terms p * (log p - log m).  Where p underflowed to 0, logp is
    # still finite, so 0 * finite = 0 -> matches PyTorch kl_div's zeroing.
    term = p0 * (logp0 - logm) + p1 * (logp1 - logm)

    def write(t):
        # Per-class partial sums over this block's rows.  The sublane-axis
        # reduce leaves the result lane-dense (1, C) -> unmasked vector stores.
        partial_ref[...] = jnp.sum(t, axis=0, keepdims=True).reshape(partial_ref.shape)

    last = pl.num_programs(0) - 1

    @pl.when(i < last)
    def _():
        write(term)

    @pl.when(i == last)
    def _():
        # Only the final (possibly ragged) block carries padding rows; mask them
        # here so Inf/NaN garbage from the padded region never reaches HBM.
        rows_left = n_rows - i * block_rows
        row_ids = jax.lax.broadcasted_iota(jnp.int32, (term.shape[0], 1), 0)
        write(jnp.where(row_ids < rows_left, term, 0.0))


# -------------------------------- wrapper -------------------------------------
def jsd_cross_entropy(output, target, alpha=12.0, block_rows=None):
    """Pallas TPU implementation of JsdCrossEntropy.forward.

    output, target: (N, C) logits (f32 or bf16; bf16 halves HBM traffic, math is
    done in f32 inside the kernel).  Returns a scalar float32 loss.
    """
    assert output.shape == target.shape and output.ndim == 2
    n, c = output.shape
    itemsize = jnp.dtype(output.dtype).itemsize
    tn = _pick_block_rows(n, c, itemsize, block_rows)
    num_blocks = -(-n // tn)

    partials = pl.pallas_call(
        functools.partial(_jsd_kernel, n_rows=n, block_rows=tn),
        out_shape=jax.ShapeDtypeStruct((num_blocks, 1, c), jnp.float32),
        grid=(num_blocks,),
        in_specs=[
            pl.BlockSpec((tn, c), lambda i: (i, 0)),
            pl.BlockSpec((tn, c), lambda i: (i, 0)),
        ],
        out_specs=pl.BlockSpec((1, 1, c), lambda i: (i, 0, 0)),
        compiler_params=pltpu.CompilerParams(
            # Each grid step owns its own output block -> batch axis is parallel
            # (lets v7x shard the >=2-step grid across its two TensorCores).
            dimension_semantics=("parallel",),
            vmem_limit_bytes=_VMEM_LIMIT_BYTES,
        ),
        cost_estimate=pl.CostEstimate(
            flops=int(16 * n * c),
            transcendentals=int(3 * n * c + 4 * n),  # 2 exp + 1 log /elem, +row log/rcp
            bytes_accessed=int(2 * n * c * itemsize + num_blocks * c * 4),
        ),
    )(output, target)

    # 'batchmean' divides by the GLOBAL batch size; the epilogue reduce is a
    # tiny lane-dense (num_blocks, 1, C) sum.
    total = jnp.sum(partials)
    return (jnp.float32(alpha) * total) / (2.0 * jnp.float32(n))


# ------------------------------- reference ------------------------------------
def _jsd_reference(output, target, alpha=12.0):
    """Pure-JAX reference mirroring the PyTorch module, for verification."""
    p0 = jax.nn.softmax(output.astype(jnp.float32), axis=-1)
    p1 = jax.nn.softmax(target.astype(jnp.float32), axis=-1)
    logm = jnp.log(jnp.clip(0.5 * (p0 + p1), 1e-7, 1.0))
    n = output.shape[0]

    def kl(p):
        safe_log_p = jnp.log(jnp.where(p > 0, p, 1.0))
        return jnp.sum(jnp.where(p > 0, p * (safe_log_p - logm), 0.0)) / n

    return alpha * (kl(p0) + kl(p1)) / 2.0


if __name__ == "__main__":
    key = jax.random.PRNGKey(0)
    k1, k2, k3, k4 = jax.random.split(key, 4)

    # Case 1: small (batch, classes) f32 — too small to split, single full block.
    N, C = 8, 128
    out1 = jax.random.normal(k1, (N, C), dtype=jnp.float32)
    tgt1 = jax.random.normal(k2, (N, C), dtype=jnp.float32)
    loss1 = jax.block_until_ready(jsd_cross_entropy(out1, tgt1, alpha=12.0))
    ref1 = _jsd_reference(out1, tgt1, alpha=12.0)
    assert jnp.allclose(loss1, ref1, rtol=1e-4, atol=1e-4), (loss1, ref1)

    # Case 2: N and C not multiples of (8, 128); auto tile sizing splits into
    # >= 2 blocks (megacore path) with a padded ragged final block.
    N2, C2 = 300, 200
    out2 = 2.0 * jax.random.normal(k3, (N2, C2), dtype=jnp.float32)
    tgt2 = 2.0 * jax.random.normal(k4, (N2, C2), dtype=jnp.float32)
    loss2 = jax.block_until_ready(jsd_cross_entropy(out2, tgt2, alpha=12.0))
    ref2 = _jsd_reference(out2, tgt2, alpha=12.0)
    assert jnp.allclose(loss2, ref2, rtol=1e-4, atol=1e-4), (loss2, ref2)

    # Case 2b: explicit block_rows -> 3-step grid, ragged masked final block.
    loss2b = jax.block_until_ready(
        jsd_cross_entropy(out2, tgt2, alpha=12.0, block_rows=128))
    assert jnp.allclose(loss2b, ref2, rtol=1e-4, atol=1e-4), (loss2b, ref2)

    # Case 3: bf16 logits straight from HBM (half the input bytes); in-kernel
    # math stays f32, so it matches the f32 reference on the bf16-rounded inputs.
    out3 = out1.astype(jnp.bfloat16)
    tgt3 = tgt1.astype(jnp.bfloat16)
    loss3 = jax.block_until_ready(jsd_cross_entropy(out3, tgt3, alpha=12.0))
    ref3 = _jsd_reference(out3.astype(jnp.float32), tgt3.astype(jnp.float32), alpha=12.0)
    assert jnp.allclose(loss3, ref3, rtol=1e-4, atol=1e-4), (loss3, ref3)

    print("KERNEL_OK")
</pallas_src>

<mosaic_0001>
module attributes {stable_mosaic.version = 11 : i64} {
  func.func @_jsd_kernel(%arg0: i32, %arg1: memref<8x128xf32, #tpu.memory_space<vmem>>, %arg2: memref<8x128xf32, #tpu.memory_space<vmem>>, %arg3: memref<1x1x128xf32, #tpu.memory_space<vmem>>) attributes {dimension_semantics = [#tpu.dimension_semantics<parallel>], iteration_bounds = array<i64: 1>, scalar_prefetch = 0 : i64, scratch_operands = 0 : i64, tpu.core_type = #tpu.core_type<tc>, window_params = [{transform_indices = @transform_0, window_bounds = array<i64: 8, 128>}, {transform_indices = @transform_1, window_bounds = array<i64: 8, 128>}, {transform_indices = @transform_2, window_bounds = array<i64: 1, 1, 128>}]} {
    %c0 = arith.constant 0 : index
    %c0_0 = arith.constant 0 : index
    %0 = vector.load %arg1[%c0, %c0_0] : memref<8x128xf32, #tpu.memory_space<vmem>>, vector<8x128xf32>
    %c0_1 = arith.constant 0 : index
    %c0_2 = arith.constant 0 : index
    %1 = vector.load %arg2[%c0_1, %c0_2] : memref<8x128xf32, #tpu.memory_space<vmem>>, vector<8x128xf32>
    %cst = arith.constant dense<0xFF800000> : vector<8xf32>
    %2 = vector.multi_reduction <maximumf>, %0, %cst [1] : vector<8x128xf32> to vector<8xf32>
    %3 = vector.shape_cast %2 : vector<8xf32> to vector<8x1xf32>
    %4 = vector.broadcast %3 : vector<8x1xf32> to vector<8x128xf32>
    %5 = arith.subf %0, %4 : vector<8x128xf32>
    %6 = math.exp %5 : vector<8x128xf32>
    %cst_3 = arith.constant dense<0.000000e+00> : vector<8xf32>
    %7 = vector.multi_reduction <add>, %6, %cst_3 [1] : vector<8x128xf32> to vector<8xf32>
    %8 = vector.shape_cast %7 : vector<8xf32> to vector<8x1xf32>
    %9 = tpu.reciprocal %8 {approx = true} : vector<8x1xf32> -> vector<8x1xf32>
    %10 = arith.mulf %8, %9 : vector<8x1xf32>
    %cst_4 = arith.constant 2.000000e+00 : f32
    %11 = vector.broadcast %cst_4 : f32 to vector<8x1xf32>
    %12 = arith.subf %11, %10 : vector<8x1xf32>
    %13 = arith.mulf %9, %12 : vector<8x1xf32>
    %14 = vector.broadcast %13 : vector<8x1xf32> to vector<8x128xf32>
    %15 = arith.mulf %6, %14 : vector<8x128xf32>
    %16 = math.log %8 : vector<8x1xf32>
    %17 = vector.broadcast %16 : vector<8x1xf32> to vector<8x128xf32>
    %18 = arith.subf %5, %17 : vector<8x128xf32>
    %cst_5 = arith.constant dense<0xFF800000> : vector<8xf32>
    %19 = vector.multi_reduction <maximumf>, %1, %cst_5 [1] : vector<8x128xf32> to vector<8xf32>
    %20 = vector.shape_cast %19 : vector<8xf32> to vector<8x1xf32>
    %21 = vector.broadcast %20 : vector<8x1xf32> to vector<8x128xf32>
    %22 = arith.subf %1, %21 : vector<8x128xf32>
    %23 = math.exp %22 : vector<8x128xf32>
    %cst_6 = arith.constant dense<0.000000e+00> : vector<8xf32>
    %24 = vector.multi_reduction <add>, %23, %cst_6 [1] : vector<8x128xf32> to vector<8xf32>
    %25 = vector.shape_cast %24 : vector<8xf32> to vector<8x1xf32>
    %26 = tpu.reciprocal %25 {approx = true} : vector<8x1xf32> -> vector<8x1xf32>
    %27 = arith.mulf %25, %26 : vector<8x1xf32>
    %cst_7 = arith.constant 2.000000e+00 : f32
    %28 = vector.broadcast %cst_7 : f32 to vector<8x1xf32>
    %29 = arith.subf %28, %27 : vector<8x1xf32>
    %30 = arith.mulf %26, %29 : vector<8x1xf32>
    %31 = vector.broadcast %30 : vector<8x1xf32> to vector<8x128xf32>
    %32 = arith.mulf %23, %31 : vector<8x128xf32>
    %33 = math.log %25 : vector<8x1xf32>
    %34 = vector.broadcast %33 : vector<8x1xf32> to vector<8x128xf32>
    %35 = arith.subf %22, %34 : vector<8x128xf32>
    %36 = arith.addf %15, %32 : vector<8x128xf32>
    %cst_8 = arith.constant 5.000000e-01 : f32
    %37 = vector.broadcast %cst_8 : f32 to vector<8x128xf32>
    %38 = arith.mulf %37, %36 : vector<8x128xf32>
    %cst_9 = arith.constant 1.000000e-07 : f32
    %cst_10 = arith.constant 1.000000e+00 : f32
    %39 = vector.broadcast %cst_9 : f32 to vector<8x128xf32>
    %40 = arith.maximumf %39, %38 : vector<8x128xf32>
    %41 = vector.broadcast %cst_10 : f32 to vector<8x128xf32>
    %42 = arith.minimumf %41, %40 : vector<8x128xf32>
    %43 = math.log %42 : vector<8x128xf32>
    %44 = arith.subf %18, %43 : vector<8x128xf32>
    %45 = arith.mulf %15, %44 : vector<8x128xf32>
    %46 = arith.subf %35, %43 : vector<8x128xf32>
    %47 = arith.mulf %32, %46 : vector<8x128xf32>
    %48 = arith.addf %45, %47 : vector<8x128xf32>
    %c0_i32 = arith.constant 0 : i32
    %49 = arith.cmpi slt, %arg0, %c0_i32 : i32
    %50 = arith.extui %49 : i1 to i32
    %c0_i32_11 = arith.constant 0 : i32
    %51 = arith.cmpi ne, %50, %c0_i32_11 : i32
    scf.if %51 {
      %cst_14 = arith.constant dense<0.000000e+00> : vector<128xf32>
      %55 = vector.multi_reduction <add>, %48, %cst_14 [0] : vector<8x128xf32> to vector<128xf32>
      %56 = vector.shape_cast %55 : vector<128xf32> to vector<1x128xf32>
      %57 = vector.shape_cast %56 : vector<1x128xf32> to vector<1x1x128xf32>
      %c0_15 = arith.constant 0 : index
      %c0_16 = arith.constant 0 : index
      %c0_17 = arith.constant 0 : index
      %58 = vector.load %arg3[%c0_15, %c0_16, %c0_17] : memref<1x1x128xf32, #tpu.memory_space<vmem>>, vector<1x1x128xf32>
      tpu.vector_store %arg3[%c0_15, %c0_16, %c0_17], %57 {strides = array<i32>} : memref<1x1x128xf32, #tpu.memory_space<vmem>>, vector<1x1x128xf32>,
    } else {
    }
    %c0_i32_12 = arith.constant 0 : i32
    %52 = arith.cmpi eq, %arg0, %c0_i32_12 : i32
    %53 = arith.extui %52 : i1 to i32
    %c0_i32_13 = arith.constant 0 : i32
    %54 = arith.cmpi ne, %53, %c0_i32_13 : i32
    scf.if %54 {
      %c8_i32 = arith.constant 8 : i32
      %55 = arith.muli %arg0, %c8_i32 : i32
      %c8_i32_14 = arith.constant 8 : i32
      %56 = arith.subi %c8_i32_14, %55 : i32
      %57 = tpu.iota {dimensions = array<i32: 0>} : vector<8x1xi32>
      %58 = vector.broadcast %56 : i32 to vector<8x1xi32>
      %59 = arith.cmpi slt, %57, %58 : vector<8x1xi32>
      %cst_15 = arith.constant 0.000000e+00 : f32
      %60 = vector.shape_cast %59 : vector<8x1xi1> to vector<8x1xi1>
      %61 = vector.broadcast %60 : vector<8x1xi1> to vector<8x128xi1>
      %62 = vector.broadcast %cst_15 : f32 to vector<8x128xf32>
      %63 = arith.select %61, %48, %62 : vector<8x128xi1>, vector<8x128xf32>
      %cst_16 = arith.constant dense<0.000000e+00> : vector<128xf32>
      %64 = vector.multi_reduction <add>, %63, %cst_16 [0] : vector<8x128xf32> to vector<128xf32>
      %65 = vector.shape_cast %64 : vector<128xf32> to vector<1x128xf32>
      %66 = vector.shape_cast %65 : vector<1x128xf32> to vector<1x1x128xf32>
      %c0_17 = arith.constant 0 : index
      %c0_18 = arith.constant 0 : index
      %c0_19 = arith.constant 0 : index
      %67 = vector.load %arg3[%c0_17, %c0_18, %c0_19] : memref<1x1x128xf32, #tpu.memory_space<vmem>>, vector<1x1x128xf32>
      tpu.vector_store %arg3[%c0_17, %c0_18, %c0_19], %66 {strides = array<i32>} : memref<1x1x128xf32, #tpu.memory_space<vmem>>, vector<1x1x128xf32>,
    } else {
    }
    return
  }
  func.func @transform_0(%arg0: i32) -> (i32, i32) {
    %c0_i32 = arith.constant 0 : i32
    %c0_i32_0 = arith.constant 0 : i32
    return %arg0, %c0_i32 : i32, i32
  }
  func.func @transform_1(%arg0: i32) -> (i32, i32) {
    %c0_i32 = arith.constant 0 : i32
    %c0_i32_0 = arith.constant 0 : i32
    return %arg0, %c0_i32 : i32, i32
  }
  func.func @transform_2(%arg0: i32) -> (i32, i32, i32) {
    %c0_i32 = arith.constant 0 : i32
    %c0_i32_0 = arith.constant 0 : i32
    %c0_i32_1 = arith.constant 0 : i32
    return %arg0, %c0_i32, %c0_i32_0 : i32, i32, i32
  }
}

</mosaic_0001>

<llo_original>
// kernel: tpu_custom_call.1
$region0: #{tpu_custom_call.1}
  #allocation0 [shape = 'u32[]', space=smem, size = 0x4, offset = 0x4, fixed_abs, tag = 'smem constant byte address 0x4 - core index']
  #allocation1 [shape = 'u32[144,128]{1,0:T(1,128)}', space=vmem, size = 0x12000, scoped, tag = 'internal scratch']
  %s0 = inlined_call_operand.hbm [shape: f32[8,128], index: 0, kind: input, shape index: {}]
  %s1 = inlined_call_operand.hbm [shape: f32[8,128], index: 1, kind: input, shape index: {}]
  %s2 = inlined_call_operand.hbm [shape: f32[1,1,128], index: 2, kind: output, shape index: {}]
  %s3 = sld [smem:[#allocation0]]
  $region34: #{tpu_custom_call.1} parent=0
    _
  %s5 = ssub.s32 1, %s3
  %s6 = scalar_select 0, %s5, %s3
  $region1: #{tpu_custom_call.1} parent=0
    #allocation2 [shape = 'u8[4096]{0}', space=vmem, size = 0x1000, scoped, tag = 'input window, operand 0, single buffered']
    #allocation3 [shape = 's32[1]{0}', space=sflag, size = 0x4, scoped, tag = 'scoped memory for tpu_custom_call.1']
    #allocation4 [shape = 's32[1]{0}', space=sflag, size = 0x4, scoped, tag = 'scoped memory for tpu_custom_call.1']
    #allocation5 [shape = 'u8[4096]{0}', space=vmem, size = 0x1000, scoped, tag = 'input window, operand 1, single buffered']
    #allocation6 [shape = 's32[1]{0}', space=sflag, size = 0x4, scoped, tag = 'scoped memory for tpu_custom_call.1']
    #allocation7 [shape = 'u8[512]{0}', space=vmem, size = 0x400, scoped, tag = 'output window, operand 0, single buffered']
    %7 = vsyncpa [#allocation3], 0
    %8 = vsyncpa [#allocation6], 0
    %9 = vsyncpa [#allocation4], 0
    // Predicated region
    $region2: #{tpu_custom_call.1} parent=1 // pred_check
      _
    $region3: #{tpu_custom_call.1} parent=1 // pred_check_branch
      %11 = sbr.rel (0) target = $region5
    $region4: #{tpu_custom_call.1} parent=1 // pred_region
      %s13 = ssub.s32 128, 128
      %14 = vsyncadd [#allocation3], %s13
      %s16 = sshll.u32 [#allocation2], 4
      %s17 = int_to_ptr.vmem [resolvable:$true] %s16
      %19 = dma.hbm_to_vmem [thread:$0]  %s0, 128, %s17, [#allocation3]
    $region5: #{tpu_custom_call.1} parent=1 // pred_fallthru
      _
    // Predicated region
    $region6: #{tpu_custom_call.1} parent=1 // pred_check
      _
    $region7: #{tpu_custom_call.1} parent=1 // pred_check_branch
      %21 = sbr.rel (0) target = $region9
    $region8: #{tpu_custom_call.1} parent=1 // pred_region
      %s23 = ssub.s32 128, 128
      %24 = vsyncadd [#allocation6], %s23
      %s26 = sshll.u32 [#allocation5], 4
      %s27 = int_to_ptr.vmem [resolvable:$true] %s26
      %29 = dma.hbm_to_vmem [thread:$0]  %s1, 128, %s27, [#allocation6]
    $region9: #{tpu_custom_call.1} parent=1 // pred_fallthru
      _
    // Predicated region
    $region10: #{tpu_custom_call.1} parent=1 // pred_check
      _
    $region11: #{tpu_custom_call.1} parent=1 // pred_check_branch
      %31 = sbr.rel (0) target = $region13
    $region12: #{tpu_custom_call.1} parent=1 // pred_region
      %32 = dma.done [#allocation3], 128
    $region13: #{tpu_custom_call.1} parent=1 // pred_fallthru
      _
    // Predicated region
    $region14: #{tpu_custom_call.1} parent=1 // pred_check
      _
    $region15: #{tpu_custom_call.1} parent=1 // pred_check_branch
      %34 = sbr.rel (0) target = $region17
    $region16: #{tpu_custom_call.1} parent=1 // pred_region
      %35 = dma.done [#allocation6], 128
    $region17: #{tpu_custom_call.1} parent=1 // pred_fallthru
      _
    %v36 = vld [vmem:[#allocation2] sm:$0xff]
    %v37 = vld [vmem:[#allocation5] sm:$0xff]
    %38 = vmax.xlane.f32.xlu0 %v36
    %v39 = vpop.xlane.xlu0 %38
    %v40 = vsub.f32 %v36, %v39
    %v41 = vmul.f32 %v40, 1.442695
    %v42 = vpow.pop %v41
    %43 = vadd.xlane.f32.xlu0 %v42
    %v44 = vpop.xlane.xlu0 %43
    %v45 = vrcp.pop %v44
    %v46 = vmul.f32 %v44, %v45
    %v47 = vsub.f32 2.0, %v46
    %v48 = vmul.f32 %v45, %v47
    %v49 = vmul.f32 %v42, %v48
    %v50 = vlog2.pop %v44
    %v51 = vmul.f32 %v50, 0.6931472
    %v52 = vsub.f32 %v40, %v51
    %53 = vmax.xlane.f32.xlu0 %v37
    %v54 = vpop.xlane.xlu0 %53
    %v55 = vsub.f32 %v37, %v54
    %v56 = vmul.f32 %v55, 1.442695
    %v57 = vpow.pop %v56
    %58 = vadd.xlane.f32.xlu0 %v57
    %v59 = vpop.xlane.xlu0 %58
    %v60 = vrcp.pop %v59
    %v61 = vmul.f32 %v59, %v60
    %v62 = vsub.f32 2.0, %v61
    %v63 = vmul.f32 %v60, %v62
    %v64 = vmul.f32 %v57, %v63
    %v65 = vlog2.pop %v59
    %v66 = vmul.f32 %v65, 0.6931472
    %v67 = vsub.f32 %v55, %v66
    %v68 = vadd.f32 %v49, %v64
    %v69 = vmul.f32 %v68, 0.5
    %v70 = vmax.f32 %v69, 1e-07
    %v71 = vmin.f32 %v70, 1.0
    %v72 = vlog2.pop %v71
    %v73 = vmul.f32 %v72, 0.6931472
    %v74 = vsub.f32 %v52, %v73
    %v75 = vmul.f32 %v49, %v74
    %v76 = vsub.f32 %v67, %v73
    %v77 = vmul.f32 %v64, %v76
    %v78 = vadd.f32 %v75, %v77
    %p79 = scmp.lt.s32.totalorder 0, 0
    // Predicated region
    $region18: #{tpu_custom_call.1} parent=1 // pred_check
      %p80 = pneg %p79
    $region19: #{tpu_custom_call.1} parent=1 // pred_check_branch
      %82 = sbr.rel (%p80) target = $region21
    $region20: #{tpu_custom_call.1} parent=1 // pred_region
      %v83 = vrot.slane %v78, 4
      %v84 = vadd.f32 %v78, %v83
      %v85 = vrot.slane %v84, 2
      %v86 = vadd.f32 %v84, %v85
      %v87 = vrot.slane %v86, 1
      %v88 = vadd.f32 %v86, %v87
      %89 = vst [vmem:[#allocation7] sm:$0x1] %v88
    $region21: #{tpu_custom_call.1} parent=1 // pred_fallthru
      _
    %p90 = scmp.eq.s32.totalorder 0, 0
    // Predicated region
    $region22: #{tpu_custom_call.1} parent=1 // pred_check
      %p91 = pneg %p90
    $region23: #{tpu_custom_call.1} parent=1 // pred_check_branch
      %93 = sbr.rel (%p91) target = $region25
    $region24: #{tpu_custom_call.1} parent=1 // pred_region
      %s94 = smul.u32 0, 8
      %s95 = ssub.s32 8, %s94
      %v96 = vlaneseq
      %v97 = vshrl.u32 %v96, 7
      %v98 = vstv %s95
      %vm99 = vcmp.lt.s32.totalorder %v97, %v98
      %v100 = vsel %vm99, 1, 0
      %vm101 = vcmp.eq.s32.totalorder %v100, 1
      %v102 = vsel %vm101, %v78, 0.0
      %v103 = vrot.slane %v102, 4
      %v104 = vadd.f32 %v102, %v103
      %v105 = vrot.slane %v104, 2
      %v106 = vadd.f32 %v104, %v105
      %v107 = vrot.slane %v106, 1
      %v108 = vadd.f32 %v106, %v107
      %109 = vst [vmem:[#allocation7] sm:$0x1] %v108
    $region25: #{tpu_custom_call.1} parent=1 // pred_fallthru
      _
    // Predicated region
    $region26: #{tpu_custom_call.1} parent=1 // pred_check
      _
    $region27: #{tpu_custom_call.1} parent=1 // pred_check_branch
      %111 = sbr.rel (0) target = $region29
    $region28: #{tpu_custom_call.1} parent=1 // pred_region
      %s113 = ssub.s32 16, 16
      %114 = vsyncadd [#allocation4], %s113
      %s116 = sshll.u32 [#allocation7], 4
      %s117 = int_to_ptr.vmem [resolvable:$true] %s116
      %119 = dma.vmem_to_hbm [thread:$0]  %s117, 16, %s2, [#allocation4]
    $region29: #{tpu_custom_call.1} parent=1 // pred_fallthru
      _
    // Predicated region
    $region30: #{tpu_custom_call.1} parent=1 // pred_check
      _
    $region31: #{tpu_custom_call.1} parent=1 // pred_check_branch
      %121 = sbr.rel (0) target = $region33
    $region32: #{tpu_custom_call.1} parent=1 // pred_region
      %122 = dma.done [#allocation4], 16
    $region33: #{tpu_custom_call.1} parent=1 // pred_fallthru
      _
    %123 = vsyncpa [#allocation3], 1
    %124 = vsyncpa [#allocation6], 1
    %125 = vsyncpa [#allocation4], 1

</llo_original>
